<compile_context>
chip_gen: v7x
topology: tpu7x:2x2x1
jax: 0.10.0
libtpu: 0.0.40
codegen_flags: <defaults>
</compile_context>

<pallas_src>
import jax
import jax.numpy as jnp
from jax.experimental import pallas as pl
from jax.experimental.pallas import tpu as pltpu


def _make_recurrence_kernel(t_blk, total_t):
    """Build the per-time-block GRU recurrence kernel (t_blk, total_t are static)."""
    exact = (total_t % t_blk) == 0

    def kernel(gx_ref, wh_ref, bhn_ref, h_ref):
        # gx_ref : (t_blk, B, 3H) precomputed input gates (+ fused biases), time-major
        # wh_ref : (H, 3H)        fused recurrent weights [W_hr | W_hz | W_hn] (pre-transposed)
        # bhn_ref: (1, H)         b_hn, kept separate because r gates it
        # h_ref  : (B, H)         running hidden state (resident output accumulator)
        i = pl.program_id(0)

        @pl.when(i == 0)
        def _():
            h_ref[...] = jnp.zeros_like(h_ref)

        _, b_blk, _ = gx_ref.shape
        hidden = wh_ref.shape[0]

        # Hoist loop-invariant loads / broadcasts out of the time loop
        # (JAX does not CSE broadcast_in_dim inside a traced loop body).
        wh = wh_ref[...]                                                  # (H, 3H)
        bhn = jnp.broadcast_to(bhn_ref[...].astype(jnp.float32), (b_blk, hidden))

        def step(t, h):
            gx_t = gx_ref[t].astype(jnp.float32)                          # (B, 3H)
            gh = jnp.dot(h.astype(wh.dtype), wh,
                         preferred_element_type=jnp.float32)              # (B, 3H) MXU
            # r and z share one fused add + sigmoid over the first 2H lanes.
            rz = jax.nn.sigmoid(gx_t[:, :2 * hidden] + gh[:, :2 * hidden])
            r = rz[:, :hidden]
            z = rz[:, hidden:]
            n = jnp.tanh(gx_t[:, 2 * hidden:] + r * (gh[:, 2 * hidden:] + bhn))
            return (1.0 - z) * n + z * h

        if exact:
            # Static trip count: let LLO see the schedule; unroll short loops.
            h_ref[...] = jax.lax.fori_loop(0, t_blk, step, h_ref[...],
                                           unroll=t_blk <= 32)
        else:
            # Last block may be partial (time axis was zero-padded in the wrapper).
            steps = jnp.minimum(t_blk, total_t - i * t_blk)
            h_ref[...] = jax.lax.fori_loop(0, steps, step, h_ref[...])

    return kernel


def expert_gru_forward(x, params, compute_dtype=jnp.bfloat16, max_time_block=128):
    """x: (B, T, D) float32.  Returns hidden[-1]: (B, H) float32."""
    B, T, D = x.shape
    H = params["w_hr"].shape[0]

    if T == 0:  # zero-length sequence -> initial hidden state (zeros)
        return jnp.zeros((B, H), jnp.float32)

    # Fused input-side weights / biases, gate order [r | z | n].
    w_i = jnp.concatenate([params["w_ir"], params["w_iz"], params["w_in"]],
                          axis=0).T                                       # (D, 3H)
    b_i = jnp.concatenate([params["b_ir"] + params["b_hr"],
                           params["b_iz"] + params["b_hz"],
                           params["b_in"]])                               # (3H,)

    # One big batched GEMM over all (t, b) rows, written time-major so no
    # transpose of x is ever materialized. f32 accumulation, compute_dtype storage.
    gx = jnp.einsum("btd,dg->tbg",
                    x.astype(compute_dtype), w_i.astype(compute_dtype),
                    preferred_element_type=jnp.float32) + b_i
    gx = gx.astype(compute_dtype)                                         # (T, B, 3H)

    # Fused recurrent weights (single N=3H matmul per step in the kernel).
    w_h = jnp.concatenate([params["w_hr"], params["w_hz"], params["w_hn"]],
                          axis=0).T.astype(compute_dtype)                 # (H, 3H)
    b_hn = params["b_hn"].reshape(1, H).astype(jnp.float32)

    # Coarse time blocks; zero-pad T so every grid step sees a full block and the
    # kernel clamps the trip count on the last (partial) block.
    t_blk = min(T, max_time_block)
    num_blocks = -(-T // t_blk)
    T_pad = num_blocks * t_blk
    if T_pad != T:
        gx = jnp.pad(gx, ((0, T_pad - T), (0, 0), (0, 0)))

    kernel = _make_recurrence_kernel(t_blk, T)

    # NOTE: the weight/bias index maps are constant across the grid; at production
    # sizes (large H) single-buffer them so resident weights fit v7x's 64 MiB VMEM.
    return pl.pallas_call(
        kernel,
        out_shape=jax.ShapeDtypeStruct((B, H), jnp.float32),
        grid_spec=pltpu.PrefetchScalarGridSpec(
            num_scalar_prefetch=0,
            grid=(num_blocks,),
            in_specs=[
                pl.BlockSpec((t_blk, B, 3 * H), lambda i: (i, 0, 0)),  # gx time blocks
                pl.BlockSpec((H, 3 * H), lambda i: (0, 0)),            # fused W_h
                pl.BlockSpec((1, H), lambda i: (0, 0)),                # b_hn
            ],
            out_specs=pl.BlockSpec((B, H), lambda i: (0, 0)),          # resident hidden
        ),
        compiler_params=pltpu.CompilerParams(
            # Time recurrence + resident hidden-state output => must stay sequential.
            dimension_semantics=("arbitrary",),
            vmem_limit_bytes=32 * 1024 * 1024,
        ),
    )(gx, w_h, b_hn)


def init_gru_params(key, input_size, hidden_size):
    """Deterministic init mirroring nn.GRU's U(-1/sqrt(H), 1/sqrt(H))."""
    k = 1.0 / jnp.sqrt(hidden_size)
    names_shapes = [
        ("w_ir", (hidden_size, input_size)),
        ("w_iz", (hidden_size, input_size)),
        ("w_in", (hidden_size, input_size)),
        ("w_hr", (hidden_size, hidden_size)),
        ("w_hz", (hidden_size, hidden_size)),
        ("w_hn", (hidden_size, hidden_size)),
        ("b_ir", (hidden_size,)), ("b_iz", (hidden_size,)), ("b_in", (hidden_size,)),
        ("b_hr", (hidden_size,)), ("b_hz", (hidden_size,)), ("b_hn", (hidden_size,)),
    ]
    keys = jax.random.split(key, len(names_shapes))
    return {
        name: jax.random.uniform(kk, shape, jnp.float32, minval=-k, maxval=k)
        for kk, (name, shape) in zip(keys, names_shapes)
    }


def gru_reference(x, params):
    """Pure-JAX f32 reference (lax.scan) matching PyTorch nn.GRU semantics."""
    B, T, D = x.shape
    H = params["w_hr"].shape[0]
    h0 = jnp.zeros((B, H), jnp.float32)

    def step(h, x_t):
        r = jax.nn.sigmoid(x_t @ params["w_ir"].T + params["b_ir"]
                           + h @ params["w_hr"].T + params["b_hr"])
        z = jax.nn.sigmoid(x_t @ params["w_iz"].T + params["b_iz"]
                           + h @ params["w_hz"].T + params["b_hz"])
        n = jnp.tanh(x_t @ params["w_in"].T + params["b_in"]
                     + r * (h @ params["w_hn"].T + params["b_hn"]))
        h_new = (1.0 - z) * n + z * h
        return h_new, None

    h_last, _ = jax.lax.scan(step, h0, jnp.transpose(x, (1, 0, 2)))
    return h_last


if __name__ == "__main__":
    B, T, D, H = 2, 8, 32, 32  # batch, seq, input_size, hidden_size

    key = jax.random.PRNGKey(0)
    k_x, k_p = jax.random.split(key)
    x = jax.random.normal(k_x, (B, T, D), jnp.float32)
    params = init_gru_params(k_p, D, H)

    ref = gru_reference(x, params)

    # f32 compute path: tight check against the PyTorch-equivalent reference.
    out_f32 = jax.block_until_ready(
        jax.jit(lambda a, p: expert_gru_forward(a, p, compute_dtype=jnp.float32))(x, params))
    assert out_f32.shape == (B, H)
    assert jnp.allclose(out_f32, ref, atol=1e-5, rtol=1e-5), "f32 mismatch vs reference"

    # Default bf16-operand path (f32 accumulation): looser tolerance.
    out_bf16 = jax.block_until_ready(jax.jit(expert_gru_forward)(x, params))
    assert out_bf16.shape == (B, H)
    assert jnp.allclose(out_bf16, ref, atol=2e-2, rtol=2e-2), "bf16 mismatch vs reference"

    # Exercise the padded / partial-last-block path (T not a multiple of the block).
    T2 = 7
    x2 = jax.random.normal(jax.random.PRNGKey(1), (B, T2, D), jnp.float32)
    ref2 = gru_reference(x2, params)
    out2 = jax.block_until_ready(
        jax.jit(lambda a, p: expert_gru_forward(a, p, compute_dtype=jnp.float32,
                                                max_time_block=4))(x2, params))
    assert jnp.allclose(out2, ref2, atol=1e-5, rtol=1e-5), "partial-block mismatch"

    print("KERNEL_OK")
</pallas_src>

<mosaic_0001>
module attributes {stable_mosaic.version = 11 : i64} {
  func.func @kernel(%arg0: i32, %arg1: memref<8x2x96xf32, #tpu.memory_space<vmem>>, %arg2: memref<32x96xf32, #tpu.memory_space<vmem>>, %arg3: memref<1x32xf32, #tpu.memory_space<vmem>>, %arg4: memref<2x32xf32, #tpu.memory_space<vmem>>) attributes {dimension_semantics = [#tpu.dimension_semantics<arbitrary>], iteration_bounds = array<i64: 1>, scalar_prefetch = 0 : i64, scratch_operands = 0 : i64, tpu.core_type = #tpu.core_type<tc>, window_params = [{transform_indices = @transform_0, window_bounds = array<i64: 8, 2, 96>}, {pipeline_mode = #tpu.pipeline_mode<synchronous>, transform_indices = @transform_1, window_bounds = array<i64: 32, 96>}, {pipeline_mode = #tpu.pipeline_mode<synchronous>, transform_indices = @transform_2, window_bounds = array<i64: 1, 32>}, {pipeline_mode = #tpu.pipeline_mode<synchronous>, transform_indices = @transform_3, window_bounds = array<i64: 2, 32>}]} {
    %c0_i32 = arith.constant 0 : i32
    %0 = arith.cmpi eq, %arg0, %c0_i32 : i32
    %1 = arith.extui %0 : i1 to i32
    %c0_i32_0 = arith.constant 0 : i32
    %2 = arith.cmpi ne, %1, %c0_i32_0 : i32
    scf.if %2 {
      %cst_48 = arith.constant 0.000000e+00 : f32
      %209 = vector.broadcast %cst_48 : f32 to vector<2x32xf32>
      %c0_49 = arith.constant 0 : index
      %c0_50 = arith.constant 0 : index
      %210 = vector.load %arg4[%c0_49, %c0_50] : memref<2x32xf32, #tpu.memory_space<vmem>>, vector<2x32xf32>
      tpu.vector_store %arg4[%c0_49, %c0_50], %209 {strides = array<i32>} : memref<2x32xf32, #tpu.memory_space<vmem>>, vector<2x32xf32>,
    } else {
    }
    %c0 = arith.constant 0 : index
    %c0_1 = arith.constant 0 : index
    %3 = vector.load %arg2[%c0, %c0_1] : memref<32x96xf32, #tpu.memory_space<vmem>>, vector<32x96xf32>
    %c0_2 = arith.constant 0 : index
    %c0_3 = arith.constant 0 : index
    %4 = vector.load %arg3[%c0_2, %c0_3] : memref<1x32xf32, #tpu.memory_space<vmem>>, vector<1x32xf32>
    %5 = vector.shape_cast %4 : vector<1x32xf32> to vector<1x32xf32>
    %6 = vector.broadcast %5 : vector<1x32xf32> to vector<2x32xf32>
    %c0_4 = arith.constant 0 : index
    %c0_5 = arith.constant 0 : index
    %7 = vector.load %arg4[%c0_4, %c0_5] : memref<2x32xf32, #tpu.memory_space<vmem>>, vector<2x32xf32>
    %c0_i32_6 = arith.constant 0 : i32
    %8 = arith.index_cast %c0_i32_6 : i32 to index
    %c0_7 = arith.constant 0 : index
    %c0_8 = arith.constant 0 : index
    %9 = vector.load %arg1[%8, %c0_7, %c0_8] : memref<8x2x96xf32, #tpu.memory_space<vmem>>, vector<1x2x96xf32>
    %10 = vector.shape_cast %9 : vector<1x2x96xf32> to vector<2x96xf32>
    %cst = arith.constant dense<0.000000e+00> : vector<2x96xf32>
    %11 = tpu.matmul %7, %3, %cst {dimension_numbers = #tpu.dot_dimension_numbers<[1], [0], [0], [1], [0, 0, 1, 1], [], []>} : vector<2x32xf32>, vector<32x96xf32>, vector<2x96xf32> -> vector<2x96xf32>
    %12 = vector.extract_strided_slice %10 {offsets = [0, 0], sizes = [2, 64], strides = [1, 1]} : vector<2x96xf32> to vector<2x64xf32>
    %13 = vector.extract_strided_slice %11 {offsets = [0, 0], sizes = [2, 64], strides = [1, 1]} : vector<2x96xf32> to vector<2x64xf32>
    %14 = arith.addf %12, %13 : vector<2x64xf32>
    %15 = arith.negf %14 : vector<2x64xf32>
    %16 = math.exp %15 : vector<2x64xf32>
    %cst_9 = arith.constant 1.000000e+00 : f32
    %17 = vector.broadcast %cst_9 : f32 to vector<2x64xf32>
    %18 = arith.addf %17, %16 : vector<2x64xf32>
    %19 = arith.divf %17, %18 : vector<2x64xf32>
    %20 = vector.extract_strided_slice %19 {offsets = [0, 0], sizes = [2, 32], strides = [1, 1]} : vector<2x64xf32> to vector<2x32xf32>
    %21 = vector.extract_strided_slice %19 {offsets = [0, 32], sizes = [2, 32], strides = [1, 1]} : vector<2x64xf32> to vector<2x32xf32>
    %22 = vector.extract_strided_slice %10 {offsets = [0, 64], sizes = [2, 32], strides = [1, 1]} : vector<2x96xf32> to vector<2x32xf32>
    %23 = vector.extract_strided_slice %11 {offsets = [0, 64], sizes = [2, 32], strides = [1, 1]} : vector<2x96xf32> to vector<2x32xf32>
    %24 = arith.addf %23, %6 : vector<2x32xf32>
    %25 = arith.mulf %20, %24 : vector<2x32xf32>
    %26 = arith.addf %22, %25 : vector<2x32xf32>
    %27 = math.tanh %26 : vector<2x32xf32>
    %cst_10 = arith.constant 1.000000e+00 : f32
    %28 = vector.broadcast %cst_10 : f32 to vector<2x32xf32>
    %29 = arith.subf %28, %21 : vector<2x32xf32>
    %30 = arith.mulf %29, %27 : vector<2x32xf32>
    %31 = arith.mulf %21, %7 : vector<2x32xf32>
    %32 = arith.addf %30, %31 : vector<2x32xf32>
    %c1_i32 = arith.constant 1 : i32
    %33 = arith.index_cast %c1_i32 : i32 to index
    %c0_11 = arith.constant 0 : index
    %c0_12 = arith.constant 0 : index
    %34 = vector.load %arg1[%33, %c0_11, %c0_12] : memref<8x2x96xf32, #tpu.memory_space<vmem>>, vector<1x2x96xf32>
    %35 = vector.shape_cast %34 : vector<1x2x96xf32> to vector<2x96xf32>
    %cst_13 = arith.constant dense<0.000000e+00> : vector<2x96xf32>
    %36 = tpu.matmul %32, %3, %cst_13 {dimension_numbers = #tpu.dot_dimension_numbers<[1], [0], [0], [1], [0, 0, 1, 1], [], []>} : vector<2x32xf32>, vector<32x96xf32>, vector<2x96xf32> -> vector<2x96xf32>
    %37 = vector.extract_strided_slice %35 {offsets = [0, 0], sizes = [2, 64], strides = [1, 1]} : vector<2x96xf32> to vector<2x64xf32>
    %38 = vector.extract_strided_slice %36 {offsets = [0, 0], sizes = [2, 64], strides = [1, 1]} : vector<2x96xf32> to vector<2x64xf32>
    %39 = arith.addf %37, %38 : vector<2x64xf32>
    %40 = arith.negf %39 : vector<2x64xf32>
    %41 = math.exp %40 : vector<2x64xf32>
    %cst_14 = arith.constant 1.000000e+00 : f32
    %42 = vector.broadcast %cst_14 : f32 to vector<2x64xf32>
    %43 = arith.addf %42, %41 : vector<2x64xf32>
    %44 = arith.divf %42, %43 : vector<2x64xf32>
    %45 = vector.extract_strided_slice %44 {offsets = [0, 0], sizes = [2, 32], strides = [1, 1]} : vector<2x64xf32> to vector<2x32xf32>
    %46 = vector.extract_strided_slice %44 {offsets = [0, 32], sizes = [2, 32], strides = [1, 1]} : vector<2x64xf32> to vector<2x32xf32>
    %47 = vector.extract_strided_slice %35 {offsets = [0, 64], sizes = [2, 32], strides = [1, 1]} : vector<2x96xf32> to vector<2x32xf32>
    %48 = vector.extract_strided_slice %36 {offsets = [0, 64], sizes = [2, 32], strides = [1, 1]} : vector<2x96xf32> to vector<2x32xf32>
    %49 = arith.addf %48, %6 : vector<2x32xf32>
    %50 = arith.mulf %45, %49 : vector<2x32xf32>
    %51 = arith.addf %47, %50 : vector<2x32xf32>
    %52 = math.tanh %51 : vector<2x32xf32>
    %cst_15 = arith.constant 1.000000e+00 : f32
    %53 = vector.broadcast %cst_15 : f32 to vector<2x32xf32>
    %54 = arith.subf %53, %46 : vector<2x32xf32>
    %55 = arith.mulf %54, %52 : vector<2x32xf32>
    %56 = arith.mulf %46, %32 : vector<2x32xf32>
    %57 = arith.addf %55, %56 : vector<2x32xf32>
    %c2_i32 = arith.constant 2 : i32
    %58 = arith.index_cast %c2_i32 : i32 to index
    %c0_16 = arith.constant 0 : index
    %c0_17 = arith.constant 0 : index
    %59 = vector.load %arg1[%58, %c0_16, %c0_17] : memref<8x2x96xf32, #tpu.memory_space<vmem>>, vector<1x2x96xf32>
    %60 = vector.shape_cast %59 : vector<1x2x96xf32> to vector<2x96xf32>
    %cst_18 = arith.constant dense<0.000000e+00> : vector<2x96xf32>
    %61 = tpu.matmul %57, %3, %cst_18 {dimension_numbers = #tpu.dot_dimension_numbers<[1], [0], [0], [1], [0, 0, 1, 1], [], []>} : vector<2x32xf32>, vector<32x96xf32>, vector<2x96xf32> -> vector<2x96xf32>
    %62 = vector.extract_strided_slice %60 {offsets = [0, 0], sizes = [2, 64], strides = [1, 1]} : vector<2x96xf32> to vector<2x64xf32>
    %63 = vector.extract_strided_slice %61 {offsets = [0, 0], sizes = [2, 64], strides = [1, 1]} : vector<2x96xf32> to vector<2x64xf32>
    %64 = arith.addf %62, %63 : vector<2x64xf32>
    %65 = arith.negf %64 : vector<2x64xf32>
    %66 = math.exp %65 : vector<2x64xf32>
    %cst_19 = arith.constant 1.000000e+00 : f32
    %67 = vector.broadcast %cst_19 : f32 to vector<2x64xf32>
    %68 = arith.addf %67, %66 : vector<2x64xf32>
    %69 = arith.divf %67, %68 : vector<2x64xf32>
    %70 = vector.extract_strided_slice %69 {offsets = [0, 0], sizes = [2, 32], strides = [1, 1]} : vector<2x64xf32> to vector<2x32xf32>
    %71 = vector.extract_strided_slice %69 {offsets = [0, 32], sizes = [2, 32], strides = [1, 1]} : vector<2x64xf32> to vector<2x32xf32>
    %72 = vector.extract_strided_slice %60 {offsets = [0, 64], sizes = [2, 32], strides = [1, 1]} : vector<2x96xf32> to vector<2x32xf32>
    %73 = vector.extract_strided_slice %61 {offsets = [0, 64], sizes = [2, 32], strides = [1, 1]} : vector<2x96xf32> to vector<2x32xf32>
    %74 = arith.addf %73, %6 : vector<2x32xf32>
    %75 = arith.mulf %70, %74 : vector<2x32xf32>
    %76 = arith.addf %72, %75 : vector<2x32xf32>
    %77 = math.tanh %76 : vector<2x32xf32>
    %cst_20 = arith.constant 1.000000e+00 : f32
    %78 = vector.broadcast %cst_20 : f32 to vector<2x32xf32>
    %79 = arith.subf %78, %71 : vector<2x32xf32>
    %80 = arith.mulf %79, %77 : vector<2x32xf32>
    %81 = arith.mulf %71, %57 : vector<2x32xf32>
    %82 = arith.addf %80, %81 : vector<2x32xf32>
    %c3_i32 = arith.constant 3 : i32
    %83 = arith.index_cast %c3_i32 : i32 to index
    %c0_21 = arith.constant 0 : index
    %c0_22 = arith.constant 0 : index
    %84 = vector.load %arg1[%83, %c0_21, %c0_22] : memref<8x2x96xf32, #tpu.memory_space<vmem>>, vector<1x2x96xf32>
    %85 = vector.shape_cast %84 : vector<1x2x96xf32> to vector<2x96xf32>
    %cst_23 = arith.constant dense<0.000000e+00> : vector<2x96xf32>
    %86 = tpu.matmul %82, %3, %cst_23 {dimension_numbers = #tpu.dot_dimension_numbers<[1], [0], [0], [1], [0, 0, 1, 1], [], []>} : vector<2x32xf32>, vector<32x96xf32>, vector<2x96xf32> -> vector<2x96xf32>
    %87 = vector.extract_strided_slice %85 {offsets = [0, 0], sizes = [2, 64], strides = [1, 1]} : vector<2x96xf32> to vector<2x64xf32>
    %88 = vector.extract_strided_slice %86 {offsets = [0, 0], sizes = [2, 64], strides = [1, 1]} : vector<2x96xf32> to vector<2x64xf32>
    %89 = arith.addf %87, %88 : vector<2x64xf32>
    %90 = arith.negf %89 : vector<2x64xf32>
    %91 = math.exp %90 : vector<2x64xf32>
    %cst_24 = arith.constant 1.000000e+00 : f32
    %92 = vector.broadcast %cst_24 : f32 to vector<2x64xf32>
    %93 = arith.addf %92, %91 : vector<2x64xf32>
    %94 = arith.divf %92, %93 : vector<2x64xf32>
    %95 = vector.extract_strided_slice %94 {offsets = [0, 0], sizes = [2, 32], strides = [1, 1]} : vector<2x64xf32> to vector<2x32xf32>
    %96 = vector.extract_strided_slice %94 {offsets = [0, 32], sizes = [2, 32], strides = [1, 1]} : vector<2x64xf32> to vector<2x32xf32>
    %97 = vector.extract_strided_slice %85 {offsets = [0, 64], sizes = [2, 32], strides = [1, 1]} : vector<2x96xf32> to vector<2x32xf32>
    %98 = vector.extract_strided_slice %86 {offsets = [0, 64], sizes = [2, 32], strides = [1, 1]} : vector<2x96xf32> to vector<2x32xf32>
    %99 = arith.addf %98, %6 : vector<2x32xf32>
    %100 = arith.mulf %95, %99 : vector<2x32xf32>
    %101 = arith.addf %97, %100 : vector<2x32xf32>
    %102 = math.tanh %101 : vector<2x32xf32>
    %cst_25 = arith.constant 1.000000e+00 : f32
    %103 = vector.broadcast %cst_25 : f32 to vector<2x32xf32>
    %104 = arith.subf %103, %96 : vector<2x32xf32>
    %105 = arith.mulf %104, %102 : vector<2x32xf32>
    %106 = arith.mulf %96, %82 : vector<2x32xf32>
    %107 = arith.addf %105, %106 : vector<2x32xf32>
    %c4_i32 = arith.constant 4 : i32
    %108 = arith.index_cast %c4_i32 : i32 to index
    %c0_26 = arith.constant 0 : index
    %c0_27 = arith.constant 0 : index
    %109 = vector.load %arg1[%108, %c0_26, %c0_27] : memref<8x2x96xf32, #tpu.memory_space<vmem>>, vector<1x2x96xf32>
    %110 = vector.shape_cast %109 : vector<1x2x96xf32> to vector<2x96xf32>
    %cst_28 = arith.constant dense<0.000000e+00> : vector<2x96xf32>
    %111 = tpu.matmul %107, %3, %cst_28 {dimension_numbers = #tpu.dot_dimension_numbers<[1], [0], [0], [1], [0, 0, 1, 1], [], []>} : vector<2x32xf32>, vector<32x96xf32>, vector<2x96xf32> -> vector<2x96xf32>
    %112 = vector.extract_strided_slice %110 {offsets = [0, 0], sizes = [2, 64], strides = [1, 1]} : vector<2x96xf32> to vector<2x64xf32>
    %113 = vector.extract_strided_slice %111 {offsets = [0, 0], sizes = [2, 64], strides = [1, 1]} : vector<2x96xf32> to vector<2x64xf32>
    %114 = arith.addf %112, %113 : vector<2x64xf32>
    %115 = arith.negf %114 : vector<2x64xf32>
    %116 = math.exp %115 : vector<2x64xf32>
    %cst_29 = arith.constant 1.000000e+00 : f32
    %117 = vector.broadcast %cst_29 : f32 to vector<2x64xf32>
    %118 = arith.addf %117, %116 : vector<2x64xf32>
    %119 = arith.divf %117, %118 : vector<2x64xf32>
    %120 = vector.extract_strided_slice %119 {offsets = [0, 0], sizes = [2, 32], strides = [1, 1]} : vector<2x64xf32> to vector<2x32xf32>
    %121 = vector.extract_strided_slice %119 {offsets = [0, 32], sizes = [2, 32], strides = [1, 1]} : vector<2x64xf32> to vector<2x32xf32>
    %122 = vector.extract_strided_slice %110 {offsets = [0, 64], sizes = [2, 32], strides = [1, 1]} : vector<2x96xf32> to vector<2x32xf32>
    %123 = vector.extract_strided_slice %111 {offsets = [0, 64], sizes = [2, 32], strides = [1, 1]} : vector<2x96xf32> to vector<2x32xf32>
    %124 = arith.addf %123, %6 : vector<2x32xf32>
    %125 = arith.mulf %120, %124 : vector<2x32xf32>
    %126 = arith.addf %122, %125 : vector<2x32xf32>
    %127 = math.tanh %126 : vector<2x32xf32>
    %cst_30 = arith.constant 1.000000e+00 : f32
    %128 = vector.broadcast %cst_30 : f32 to vector<2x32xf32>
    %129 = arith.subf %128, %121 : vector<2x32xf32>
    %130 = arith.mulf %129, %127 : vector<2x32xf32>
    %131 = arith.mulf %121, %107 : vector<2x32xf32>
    %132 = arith.addf %130, %131 : vector<2x32xf32>
    %c5_i32 = arith.constant 5 : i32
    %133 = arith.index_cast %c5_i32 : i32 to index
    %c0_31 = arith.constant 0 : index
    %c0_32 = arith.constant 0 : index
    %134 = vector.load %arg1[%133, %c0_31, %c0_32] : memref<8x2x96xf32, #tpu.memory_space<vmem>>, vector<1x2x96xf32>
    %135 = vector.shape_cast %134 : vector<1x2x96xf32> to vector<2x96xf32>
    %cst_33 = arith.constant dense<0.000000e+00> : vector<2x96xf32>
    %136 = tpu.matmul %132, %3, %cst_33 {dimension_numbers = #tpu.dot_dimension_numbers<[1], [0], [0], [1], [0, 0, 1, 1], [], []>} : vector<2x32xf32>, vector<32x96xf32>, vector<2x96xf32> -> vector<2x96xf32>
    %137 = vector.extract_strided_slice %135 {offsets = [0, 0], sizes = [2, 64], strides = [1, 1]} : vector<2x96xf32> to vector<2x64xf32>
    %138 = vector.extract_strided_slice %136 {offsets = [0, 0], sizes = [2, 64], strides = [1, 1]} : vector<2x96xf32> to vector<2x64xf32>
    %139 = arith.addf %137, %138 : vector<2x64xf32>
    %140 = arith.negf %139 : vector<2x64xf32>
    %141 = math.exp %140 : vector<2x64xf32>
    %cst_34 = arith.constant 1.000000e+00 : f32
    %142 = vector.broadcast %cst_34 : f32 to vector<2x64xf32>
    %143 = arith.addf %142, %141 : vector<2x64xf32>
    %144 = arith.divf %142, %143 : vector<2x64xf32>
    %145 = vector.extract_strided_slice %144 {offsets = [0, 0], sizes = [2, 32], strides = [1, 1]} : vector<2x64xf32> to vector<2x32xf32>
    %146 = vector.extract_strided_slice %144 {offsets = [0, 32], sizes = [2, 32], strides = [1, 1]} : vector<2x64xf32> to vector<2x32xf32>
    %147 = vector.extract_strided_slice %135 {offsets = [0, 64], sizes = [2, 32], strides = [1, 1]} : vector<2x96xf32> to vector<2x32xf32>
    %148 = vector.extract_strided_slice %136 {offsets = [0, 64], sizes = [2, 32], strides = [1, 1]} : vector<2x96xf32> to vector<2x32xf32>
    %149 = arith.addf %148, %6 : vector<2x32xf32>
    %150 = arith.mulf %145, %149 : vector<2x32xf32>
    %151 = arith.addf %147, %150 : vector<2x32xf32>
    %152 = math.tanh %151 : vector<2x32xf32>
    %cst_35 = arith.constant 1.000000e+00 : f32
    %153 = vector.broadcast %cst_35 : f32 to vector<2x32xf32>
    %154 = arith.subf %153, %146 : vector<2x32xf32>
    %155 = arith.mulf %154, %152 : vector<2x32xf32>
    %156 = arith.mulf %146, %132 : vector<2x32xf32>
    %157 = arith.addf %155, %156 : vector<2x32xf32>
    %c6_i32 = arith.constant 6 : i32
    %158 = arith.index_cast %c6_i32 : i32 to index
    %c0_36 = arith.constant 0 : index
    %c0_37 = arith.constant 0 : index
    %159 = vector.load %arg1[%158, %c0_36, %c0_37] : memref<8x2x96xf32, #tpu.memory_space<vmem>>, vector<1x2x96xf32>
    %160 = vector.shape_cast %159 : vector<1x2x96xf32> to vector<2x96xf32>
    %cst_38 = arith.constant dense<0.000000e+00> : vector<2x96xf32>
    %161 = tpu.matmul %157, %3, %cst_38 {dimension_numbers = #tpu.dot_dimension_numbers<[1], [0], [0], [1], [0, 0, 1, 1], [], []>} : vector<2x32xf32>, vector<32x96xf32>, vector<2x96xf32> -> vector<2x96xf32>
    %162 = vector.extract_strided_slice %160 {offsets = [0, 0], sizes = [2, 64], strides = [1, 1]} : vector<2x96xf32> to vector<2x64xf32>
    %163 = vector.extract_strided_slice %161 {offsets = [0, 0], sizes = [2, 64], strides = [1, 1]} : vector<2x96xf32> to vector<2x64xf32>
    %164 = arith.addf %162, %163 : vector<2x64xf32>
    %165 = arith.negf %164 : vector<2x64xf32>
    %166 = math.exp %165 : vector<2x64xf32>
    %cst_39 = arith.constant 1.000000e+00 : f32
    %167 = vector.broadcast %cst_39 : f32 to vector<2x64xf32>
    %168 = arith.addf %167, %166 : vector<2x64xf32>
    %169 = arith.divf %167, %168 : vector<2x64xf32>
    %170 = vector.extract_strided_slice %169 {offsets = [0, 0], sizes = [2, 32], strides = [1, 1]} : vector<2x64xf32> to vector<2x32xf32>
    %171 = vector.extract_strided_slice %169 {offsets = [0, 32], sizes = [2, 32], strides = [1, 1]} : vector<2x64xf32> to vector<2x32xf32>
    %172 = vector.extract_strided_slice %160 {offsets = [0, 64], sizes = [2, 32], strides = [1, 1]} : vector<2x96xf32> to vector<2x32xf32>
    %173 = vector.extract_strided_slice %161 {offsets = [0, 64], sizes = [2, 32], strides = [1, 1]} : vector<2x96xf32> to vector<2x32xf32>
    %174 = arith.addf %173, %6 : vector<2x32xf32>
    %175 = arith.mulf %170, %174 : vector<2x32xf32>
    %176 = arith.addf %172, %175 : vector<2x32xf32>
    %177 = math.tanh %176 : vector<2x32xf32>
    %cst_40 = arith.constant 1.000000e+00 : f32
    %178 = vector.broadcast %cst_40 : f32 to vector<2x32xf32>
    %179 = arith.subf %178, %171 : vector<2x32xf32>
    %180 = arith.mulf %179, %177 : vector<2x32xf32>
    %181 = arith.mulf %171, %157 : vector<2x32xf32>
    %182 = arith.addf %180, %181 : vector<2x32xf32>
    %c7_i32 = arith.constant 7 : i32
    %183 = arith.index_cast %c7_i32 : i32 to index
    %c0_41 = arith.constant 0 : index
    %c0_42 = arith.constant 0 : index
    %184 = vector.load %arg1[%183, %c0_41, %c0_42] : memref<8x2x96xf32, #tpu.memory_space<vmem>>, vector<1x2x96xf32>
    %185 = vector.shape_cast %184 : vector<1x2x96xf32> to vector<2x96xf32>
    %cst_43 = arith.constant dense<0.000000e+00> : vector<2x96xf32>
    %186 = tpu.matmul %182, %3, %cst_43 {dimension_numbers = #tpu.dot_dimension_numbers<[1], [0], [0], [1], [0, 0, 1, 1], [], []>} : vector<2x32xf32>, vector<32x96xf32>, vector<2x96xf32> -> vector<2x96xf32>
    %187 = vector.extract_strided_slice %185 {offsets = [0, 0], sizes = [2, 64], strides = [1, 1]} : vector<2x96xf32> to vector<2x64xf32>
    %188 = vector.extract_strided_slice %186 {offsets = [0, 0], sizes = [2, 64], strides = [1, 1]} : vector<2x96xf32> to vector<2x64xf32>
    %189 = arith.addf %187, %188 : vector<2x64xf32>
    %190 = arith.negf %189 : vector<2x64xf32>
    %191 = math.exp %190 : vector<2x64xf32>
    %cst_44 = arith.constant 1.000000e+00 : f32
    %192 = vector.broadcast %cst_44 : f32 to vector<2x64xf32>
    %193 = arith.addf %192, %191 : vector<2x64xf32>
    %194 = arith.divf %192, %193 : vector<2x64xf32>
    %195 = vector.extract_strided_slice %194 {offsets = [0, 0], sizes = [2, 32], strides = [1, 1]} : vector<2x64xf32> to vector<2x32xf32>
    %196 = vector.extract_strided_slice %194 {offsets = [0, 32], sizes = [2, 32], strides = [1, 1]} : vector<2x64xf32> to vector<2x32xf32>
    %197 = vector.extract_strided_slice %185 {offsets = [0, 64], sizes = [2, 32], strides = [1, 1]} : vector<2x96xf32> to vector<2x32xf32>
    %198 = vector.extract_strided_slice %186 {offsets = [0, 64], sizes = [2, 32], strides = [1, 1]} : vector<2x96xf32> to vector<2x32xf32>
    %199 = arith.addf %198, %6 : vector<2x32xf32>
    %200 = arith.mulf %195, %199 : vector<2x32xf32>
    %201 = arith.addf %197, %200 : vector<2x32xf32>
    %202 = math.tanh %201 : vector<2x32xf32>
    %cst_45 = arith.constant 1.000000e+00 : f32
    %203 = vector.broadcast %cst_45 : f32 to vector<2x32xf32>
    %204 = arith.subf %203, %196 : vector<2x32xf32>
    %205 = arith.mulf %204, %202 : vector<2x32xf32>
    %206 = arith.mulf %196, %182 : vector<2x32xf32>
    %207 = arith.addf %205, %206 : vector<2x32xf32>
    %c8_i32 = arith.constant 8 : i32
    %c0_46 = arith.constant 0 : index
    %c0_47 = arith.constant 0 : index
    %208 = vector.load %arg4[%c0_46, %c0_47] : memref<2x32xf32, #tpu.memory_space<vmem>>, vector<2x32xf32>
    tpu.vector_store %arg4[%c0_46, %c0_47], %207 {strides = array<i32>} : memref<2x32xf32, #tpu.memory_space<vmem>>, vector<2x32xf32>,
    return
  }
  func.func @transform_0(%arg0: i32) -> (i32, i32, i32) {
    %c0_i32 = arith.constant 0 : i32
    %c0_i32_0 = arith.constant 0 : i32
    %c0_i32_1 = arith.constant 0 : i32
    return %arg0, %c0_i32, %c0_i32_0 : i32, i32, i32
  }
  func.func @transform_1(%arg0: i32) -> (i32, i32) {
    %c0_i32 = arith.constant 0 : i32
    %c0_i32_0 = arith.constant 0 : i32
    %c0_i32_1 = arith.constant 0 : i32
    return %c0_i32, %c0_i32_0 : i32, i32
  }
  func.func @transform_2(%arg0: i32) -> (i32, i32) {
    %c0_i32 = arith.constant 0 : i32
    %c0_i32_0 = arith.constant 0 : i32
    %c0_i32_1 = arith.constant 0 : i32
    return %c0_i32, %c0_i32_0 : i32, i32
  }
  func.func @transform_3(%arg0: i32) -> (i32, i32) {
    %c0_i32 = arith.constant 0 : i32
    %c0_i32_0 = arith.constant 0 : i32
    %c0_i32_1 = arith.constant 0 : i32
    return %c0_i32, %c0_i32_0 : i32, i32
  }
}

</mosaic_0001>

<llo_original>
// kernel: _lambda_.1
$region0: #{_lambda_.1}
  #allocation0 [shape = 'u32[]', space=smem, size = 0x4, offset = 0x4, fixed_abs, tag = 'smem constant byte address 0x4 - core index']
  #allocation1 [shape = 'u32[144,128]{1,0:T(1,128)}', space=vmem, size = 0x12000, scoped, tag = 'internal scratch']
  %s0 = inlined_call_operand.vmem [shape: f32[8,2,96], index: 0, kind: input, shape index: {}]
  %s1 = inlined_call_operand.vmem [shape: f32[32,96], index: 1, kind: input, shape index: {}]
  %s2 = inlined_call_operand.vmem [shape: f32[1,32], index: 2, kind: input, shape index: {}]
  %s3 = inlined_call_operand.hbm [shape: f32[2,32], index: 3, kind: output, shape index: {}]
  %s4 = sld [smem:[#allocation0]]
  $region26: #{_lambda_.1} parent=0
    _
  %s6 = ssub.s32 1, %s4
  %s7 = scalar_select 0, %s6, %s4
  $region1: #{_lambda_.1} parent=0
    #allocation2 [shape = 'u8[1024]{0}', space=vmem, size = 0x400, scoped, tag = 'output window, operand 0, single buffered']
    #allocation3 [shape = 's32[1]{0}', space=sflag, size = 0x4, scoped, tag = 'scoped memory for _lambda_.1']
    %8 = vsyncpa [#allocation3], 0
    // Predicated region
    $region2: #{_lambda_.1} parent=1 // pred_check
      _
    $region3: #{_lambda_.1} parent=1 // pred_check_branch
      %10 = sbr.rel (0) target = $region5
    $region4: #{_lambda_.1} parent=1 // pred_region
      _
    $region5: #{_lambda_.1} parent=1 // pred_fallthru
      _
    // Predicated region
    $region6: #{_lambda_.1} parent=1 // pred_check
      _
    $region7: #{_lambda_.1} parent=1 // pred_check_branch
      %12 = sbr.rel (0) target = $region9
    $region8: #{_lambda_.1} parent=1 // pred_region
      _
    $region9: #{_lambda_.1} parent=1 // pred_fallthru
      _
    // Predicated region
    $region10: #{_lambda_.1} parent=1 // pred_check
      _
    $region11: #{_lambda_.1} parent=1 // pred_check_branch
      %14 = sbr.rel (0) target = $region13
    $region12: #{_lambda_.1} parent=1 // pred_region
      _
    $region13: #{_lambda_.1} parent=1 // pred_fallthru
      _
    %p15 = scmp.eq.s32.totalorder 0, 0
    // Predicated region
    $region14: #{_lambda_.1} parent=1 // pred_check
      %p16 = pneg %p15
    $region15: #{_lambda_.1} parent=1 // pred_check_branch
      %18 = sbr.rel (%p16) target = $region17
    $region16: #{_lambda_.1} parent=1 // pred_region
      %vm19 = vcmask 254976
      %20 = vst.msk [vmem:[#allocation2] sm:$0x3] %vm19, 0.0
    $region17: #{_lambda_.1} parent=1 // pred_fallthru
      _
    %v21 = vld [vmem:[%s1] sm:$0xff]
    %v22 = vld [vmem:[%s1 + $0x8] sm:$0xff]
    %v23 = vld [vmem:[%s1 + $0x10] sm:$0xff]
    %v24 = vld [vmem:[%s1 + $0x18] sm:$0xff]
    %v25 = vld [vmem:[%s2] sm:$0x1]
    %v27 = vlaneseq
    %v28 = vshrl.u32 %v27, 7
    %v29 = vsub.s32 0, %v28
    %v30 = vrot.slane %v25, %v29
    %v31 = vld [vmem:[#allocation2] sm:$0x3]
    %v32 = vld [vmem:[%s0] sm:$0x3]
    %vm33 = vcmask 261120
    %v35 = vsel %vm33, %v31, 0
    %37 = vmatprep.subr.mxu0 0.0
    %38 = vmatpush1.msra.mxu0 %v21
    %39 = vmatprep.subr.mxu0 0.0
    %40 = vmatpush1.msra.mxu0 %v22
    %41 = vmatprep.subr.mxu0 0.0
    %42 = vmatpush1.msra.mxu0 %v23
    %43 = vmatprep.subr.mxu0 0.0
    %44 = vmatpush1.msra.mxu0 %v24
    %45 = vmatprep.subr.mxu0 0.0
    %46 = vmatpush1.msra.mxu0 0.0
    %47 = vmatprep.subr.mxu0 0.0
    %48 = vmatpush1.msra.mxu0 0.0
    %49 = vmatprep.subr.mxu0 0.0
    %50 = vmatpush1.msra.mxu0 0.0
    %51 = vmatprep.subr.mxu0 0.0
    %52 = vmatpush1.msra.mxu0 0.0
    %53 = vmatprep.subr.mxu0 0.0
    %54 = vmatpush1.msra.mxu0 0.0
    %55 = vmatprep.subr.mxu0 0.0
    %56 = vmatpush1.msra.mxu0 0.0
    %57 = vmatprep.subr.mxu0 0.0
    %58 = vmatpush1.msra.mxu0 0.0
    %59 = vmatprep.subr.mxu0 0.0
    %60 = vmatpush1.msra.mxu0 0.0
    %61 = vmatprep.subr.mxu0 0.0
    %62 = vmatpush1.msra.mxu0 0.0
    %63 = vmatprep.subr.mxu0 0.0
    %64 = vmatpush1.msra.mxu0 0.0
    %65 = vmatprep.subr.mxu0 0.0
    %66 = vmatpush1.msra.mxu0 0.0
    %67 = vmatprep.subr.mxu0 0.0
    %68 = vmatpush1.msra.mxu0 0.0
    %69 = vmatprep.subr.mxu0 0.0
    %70 = vmatpush1.msra.mxu0 0.0
    %71 = vmatprep.subr.mxu0 0.0
    %72 = vmatpush1.msra.mxu0 0.0
    %73 = vmatprep.subr.mxu0 0.0
    %74 = vmatpush1.msra.mxu0 0.0
    %75 = vmatprep.subr.mxu0 0.0
    %76 = vmatpush1.msra.mxu0 0.0
    %77 = vmatprep.subr.mxu0 0.0
    %78 = vmatpush1.msra.mxu0 0.0
    %79 = vmatprep.subr.mxu0 0.0
    %80 = vmatpush1.msra.mxu0 0.0
    %81 = vmatprep.subr.mxu0 0.0
    %82 = vmatpush1.msra.mxu0 0.0
    %83 = vmatprep.subr.mxu0 0.0
    %84 = vmatpush1.msra.mxu0 0.0
    %85 = vmatprep.subr.mxu0 0.0
    %86 = vmatpush1.msra.mxu0 0.0
    %87 = vmatprep.subr.mxu0 0.0
    %88 = vmatpush1.msra.mxu0 0.0
    %89 = vmatprep.subr.mxu0 0.0
    %90 = vmatpush1.msra.mxu0 0.0
    %91 = vmatprep.subr.mxu0 0.0
    %92 = vmatpush1.msra.mxu0 0.0
    %93 = vmatprep.subr.mxu0 0.0
    %94 = vmatpush1.msra.mxu0 0.0
    %95 = vmatprep.subr.mxu0 0.0
    %96 = vmatpush1.msra.mxu0 0.0
    %97 = vmatprep.subr.mxu0 0.0
    %98 = vmatpush1.msra.mxu0 0.0
    %99 = vmatprep.subr.mxu0 0.0
    %100 = vmatpush1.msra.mxu0 0.0
    %101 = vmatprep.mubr.f32.mxu0 0.0
    %102 = vmatmul.mubr.f32.gmra.mrb[0].mxu0 %v35
    %v103 = vpop.f32.mrb[0].mxu0
    %v104 = vadd.f32 0.0, %v103
    %v105 = vpop.f32.mrb[0].mxu0
    %106 = vdwg.mxu0
    %v107 = vadd.f32 %v32, %v104
    %v108 = vxor.u32 %v107, 2147483648
    %v109 = vmul.f32 %v108, 1.442695
    %v110 = vpow.pop %v109
    %v111 = vadd.f32 %v110, 1.0
    %v112 = vrcp.pop %v111
    %v113 = vmul.f32 1.0, %v112
    %114 = vrot.lane.b32.xlu0 %v30, 64
    %v115 = vpop.permute.xlu0 %114
    %v117 = vadd.f32 %v104, %v115
    %119 = vrot.lane.b32.xlu0 %v117, 64
    %v120 = vpop.permute.xlu0 %119
    %v122 = vmul.f32 %v113, %v120
    %124 = vrot.lane.b32.xlu0 %v122, 64
    %v125 = vpop.permute.xlu0 %124
    %v127 = vadd.f32 %v32, %v125
    %v128 = vtanh.pop %v127
    %v129 = vsub.f32 1.0, %v113
    %131 = vrot.lane.b32.xlu0 %v128, 96
    %v132 = vpop.permute.xlu0 %131
    %v134 = vmul.f32 %v129, %v132
    %135 = vrot.lane.b32.xlu0 %v31, 32
    %v136 = vpop.permute.xlu0 %135
    %v138 = vmul.f32 %v113, %v136
    %v139 = vadd.f32 %v134, %v138
    %s140 = scalar_lea.vmem %s0, 2
    %v141 = vld [vmem:[%s140] sm:$0x3]
    %143 = vrot.lane.b32.xlu0 %v139, 96
    %v144 = vpop.permute.xlu0 %143
    %v145 = vsel %vm33, %v144, 0
    %147 = vmatprep.subr.mxu0 0.0
    %148 = vmatpush1.msra.mxu0 %v21
    %149 = vmatprep.subr.mxu0 0.0
    %150 = vmatpush1.msra.mxu0 %v22
    %151 = vmatprep.subr.mxu0 0.0
    %152 = vmatpush1.msra.mxu0 %v23
    %153 = vmatprep.subr.mxu0 0.0
    %154 = vmatpush1.msra.mxu0 %v24
    %155 = vmatprep.subr.mxu0 0.0
    %156 = vmatpush1.msra.mxu0 0.0
    %157 = vmatprep.subr.mxu0 0.0
    %158 = vmatpush1.msra.mxu0 0.0
    %159 = vmatprep.subr.mxu0 0.0
    %160 = vmatpush1.msra.mxu0 0.0
    %161 = vmatprep.subr.mxu0 0.0
    %162 = vmatpush1.msra.mxu0 0.0
    %163 = vmatprep.subr.mxu0 0.0
    %164 = vmatpush1.msra.mxu0 0.0
    %165 = vmatprep.subr.mxu0 0.0
    %166 = vmatpush1.msra.mxu0 0.0
    %167 = vmatprep.subr.mxu0 0.0
    %168 = vmatpush1.msra.mxu0 0.0
    %169 = vmatprep.subr.mxu0 0.0
    %170 = vmatpush1.msra.mxu0 0.0
    %171 = vmatprep.subr.mxu0 0.0
    %172 = vmatpush1.msra.mxu0 0.0
    %173 = vmatprep.subr.mxu0 0.0
    %174 = vmatpush1.msra.mxu0 0.0
    %175 = vmatprep.subr.mxu0 0.0
    %176 = vmatpush1.msra.mxu0 0.0
    %177 = vmatprep.subr.mxu0 0.0
    %178 = vmatpush1.msra.mxu0 0.0
    %179 = vmatprep.subr.mxu0 0.0
    %180 = vmatpush1.msra.mxu0 0.0
    %181 = vmatprep.subr.mxu0 0.0
    %182 = vmatpush1.msra.mxu0 0.0
    %183 = vmatprep.subr.mxu0 0.0
    %184 = vmatpush1.msra.mxu0 0.0
    %185 = vmatprep.subr.mxu0 0.0
    %186 = vmatpush1.msra.mxu0 0.0
    %187 = vmatprep.subr.mxu0 0.0
    %188 = vmatpush1.msra.mxu0 0.0
    %189 = vmatprep.subr.mxu0 0.0
    %190 = vmatpush1.msra.mxu0 0.0
    %191 = vmatprep.subr.mxu0 0.0
    %192 = vmatpush1.msra.mxu0 0.0
    %193 = vmatprep.subr.mxu0 0.0
    %194 = vmatpush1.msra.mxu0 0.0
    %195 = vmatprep.subr.mxu0 0.0
    %196 = vmatpush1.msra.mxu0 0.0
    %197 = vmatprep.subr.mxu0 0.0
    %198 = vmatpush1.msra.mxu0 0.0
    %199 = vmatprep.subr.mxu0 0.0
    %200 = vmatpush1.msra.mxu0 0.0
    %201 = vmatprep.subr.mxu0 0.0
    %202 = vmatpush1.msra.mxu0 0.0
    %203 = vmatprep.subr.mxu0 0.0
    %204 = vmatpush1.msra.mxu0 0.0
    %205 = vmatprep.subr.mxu0 0.0
    %206 = vmatpush1.msra.mxu0 0.0
    %207 = vmatprep.subr.mxu0 0.0
    %208 = vmatpush1.msra.mxu0 0.0
    %209 = vmatprep.subr.mxu0 0.0
    %210 = vmatpush1.msra.mxu0 0.0
    %211 = vmatprep.mubr.f32.mxu0 0.0
    %212 = vmatmul.mubr.f32.gmra.mrb[0].mxu0 %v145
    %v213 = vpop.f32.mrb[0].mxu0
    %v214 = vadd.f32 0.0, %v213
    %v215 = vpop.f32.mrb[0].mxu0
    %216 = vdwg.mxu0
    %v217 = vadd.f32 %v141, %v214
    %v218 = vxor.u32 %v217, 2147483648
    %v219 = vmul.f32 %v218, 1.442695
    %v220 = vpow.pop %v219
    %v221 = vadd.f32 %v220, 1.0
    %v222 = vrcp.pop %v221
    %v223 = vmul.f32 1.0, %v222
    %v224 = vadd.f32 %v214, %v115
    %226 = vrot.lane.b32.xlu0 %v224, 64
    %v227 = vpop.permute.xlu0 %226
    %v229 = vmul.f32 %v223, %v227
    %231 = vrot.lane.b32.xlu0 %v229, 64
    %v232 = vpop.permute.xlu0 %231
    %v234 = vadd.f32 %v141, %v232
    %v235 = vtanh.pop %v234
    %v236 = vsub.f32 1.0, %v223
    %238 = vrot.lane.b32.xlu0 %v235, 96
    %v239 = vpop.permute.xlu0 %238
    %v241 = vmul.f32 %v236, %v239
    %v242 = vmul.f32 %v223, %v139
    %v243 = vadd.f32 %v241, %v242
    %s244 = scalar_lea.vmem %s0, 4
    %v245 = vld [vmem:[%s244] sm:$0x3]
    %247 = vrot.lane.b32.xlu0 %v243, 96
    %v248 = vpop.permute.xlu0 %247
    %v249 = vsel %vm33, %v248, 0
    %251 = vmatprep.subr.mxu0 0.0
    %252 = vmatpush1.msra.mxu0 %v21
    %253 = vmatprep.subr.mxu0 0.0
    %254 = vmatpush1.msra.mxu0 %v22
    %255 = vmatprep.subr.mxu0 0.0
    %256 = vmatpush1.msra.mxu0 %v23
    %257 = vmatprep.subr.mxu0 0.0
    %258 = vmatpush1.msra.mxu0 %v24
    %259 = vmatprep.subr.mxu0 0.0
    %260 = vmatpush1.msra.mxu0 0.0
    %261 = vmatprep.subr.mxu0 0.0
    %262 = vmatpush1.msra.mxu0 0.0
    %263 = vmatprep.subr.mxu0 0.0
    %264 = vmatpush1.msra.mxu0 0.0
    %265 = vmatprep.subr.mxu0 0.0
    %266 = vmatpush1.msra.mxu0 0.0
    %267 = vmatprep.subr.mxu0 0.0
    %268 = vmatpush1.msra.mxu0 0.0
    %269 = vmatprep.subr.mxu0 0.0
    %270 = vmatpush1.msra.mxu0 0.0
    %271 = vmatprep.subr.mxu0 0.0
    %272 = vmatpush1.msra.mxu0 0.0
    %273 = vmatprep.subr.mxu0 0.0
    %274 = vmatpush1.msra.mxu0 0.0
    %275 = vmatprep.subr.mxu0 0.0
    %276 = vmatpush1.msra.mxu0 0.0
    %277 = vmatprep.subr.mxu0 0.0
    %278 = vmatpush1.msra.mxu0 0.0
    %279 = vmatprep.subr.mxu0 0.0
    %280 = vmatpush1.msra.mxu0 0.0
    %281 = vmatprep.subr.mxu0 0.0
    %282 = vmatpush1.msra.mxu0 0.0
    %283 = vmatprep.subr.mxu0 0.0
    %284 = vmatpush1.msra.mxu0 0.0
    %285 = vmatprep.subr.mxu0 0.0
    %286 = vmatpush1.msra.mxu0 0.0
    %287 = vmatprep.subr.mxu0 0.0
    %288 = vmatpush1.msra.mxu0 0.0
    %289 = vmatprep.subr.mxu0 0.0
    %290 = vmatpush1.msra.mxu0 0.0
    %291 = vmatprep.subr.mxu0 0.0
    %292 = vmatpush1.msra.mxu0 0.0
    %293 = vmatprep.subr.mxu0 0.0
    %294 = vmatpush1.msra.mxu0 0.0
    %295 = vmatprep.subr.mxu0 0.0
    %296 = vmatpush1.msra.mxu0 0.0
    %297 = vmatprep.subr.mxu0 0.0
    %298 = vmatpush1.msra.mxu0 0.0
    %299 = vmatprep.subr.mxu0 0.0
    %300 = vmatpush1.msra.mxu0 0.0
    %301 = vmatprep.subr.mxu0 0.0
    %302 = vmatpush1.msra.mxu0 0.0
    %303 = vmatprep.subr.mxu0 0.0
    %304 = vmatpush1.msra.mxu0 0.0
    %305 = vmatprep.subr.mxu0 0.0
    %306 = vmatpush1.msra.mxu0 0.0
    %307 = vmatprep.subr.mxu0 0.0
    %308 = vmatpush1.msra.mxu0 0.0
    %309 = vmatprep.subr.mxu0 0.0
    %310 = vmatpush1.msra.mxu0 0.0
    %311 = vmatprep.subr.mxu0 0.0
    %312 = vmatpush1.msra.mxu0 0.0
    %313 = vmatprep.subr.mxu0 0.0
    %314 = vmatpush1.msra.mxu0 0.0
    %315 = vmatprep.mubr.f32.mxu0 0.0
    %316 = vmatmul.mubr.f32.gmra.mrb[0].mxu0 %v249
    %v317 = vpop.f32.mrb[0].mxu0
    %v318 = vadd.f32 0.0, %v317
    %v319 = vpop.f32.mrb[0].mxu0
    %320 = vdwg.mxu0
    %v321 = vadd.f32 %v245, %v318
    %v322 = vxor.u32 %v321, 2147483648
    %v323 = vmul.f32 %v322, 1.442695
    %v324 = vpow.pop %v323
    %v325 = vadd.f32 %v324, 1.0
    %v326 = vrcp.pop %v325
    %v327 = vmul.f32 1.0, %v326
    %v328 = vadd.f32 %v318, %v115
    %330 = vrot.lane.b32.xlu0 %v328, 64
    %v331 = vpop.permute.xlu0 %330
    %v333 = vmul.f32 %v327, %v331
    %335 = vrot.lane.b32.xlu0 %v333, 64
    %v336 = vpop.permute.xlu0 %335
    %v338 = vadd.f32 %v245, %v336
    %v339 = vtanh.pop %v338
    %v340 = vsub.f32 1.0, %v327
    %342 = vrot.lane.b32.xlu0 %v339, 96
    %v343 = vpop.permute.xlu0 %342
    %v345 = vmul.f32 %v340, %v343
    %v346 = vmul.f32 %v327, %v243
    %v347 = vadd.f32 %v345, %v346
    %s348 = scalar_lea.vmem %s0, 6
    %v349 = vld [vmem:[%s348] sm:$0x3]
    %351 = vrot.lane.b32.xlu0 %v347, 96
    %v352 = vpop.permute.xlu0 %351
    %v353 = vsel %vm33, %v352, 0
    %355 = vmatprep.subr.mxu0 0.0
    %356 = vmatpush1.msra.mxu0 %v21
    %357 = vmatprep.subr.mxu0 0.0
    %358 = vmatpush1.msra.mxu0 %v22
    %359 = vmatprep.subr.mxu0 0.0
    %360 = vmatpush1.msra.mxu0 %v23
    %361 = vmatprep.subr.mxu0 0.0
    %362 = vmatpush1.msra.mxu0 %v24
    %363 = vmatprep.subr.mxu0 0.0
    %364 = vmatpush1.msra.mxu0 0.0
    %365 = vmatprep.subr.mxu0 0.0
    %366 = vmatpush1.msra.mxu0 0.0
    %367 = vmatprep.subr.mxu0 0.0
    %368 = vmatpush1.msra.mxu0 0.0
    %369 = vmatprep.subr.mxu0 0.0
    %370 = vmatpush1.msra.mxu0 0.0
    %371 = vmatprep.subr.mxu0 0.0
    %372 = vmatpush1.msra.mxu0 0.0
    %373 = vmatprep.subr.mxu0 0.0
    %374 = vmatpush1.msra.mxu0 0.0
    %375 = vmatprep.subr.mxu0 0.0
    %376 = vmatpush1.msra.mxu0 0.0
    %377 = vmatprep.subr.mxu0 0.0
    %378 = vmatpush1.msra.mxu0 0.0
    %379 = vmatprep.subr.mxu0 0.0
    %380 = vmatpush1.msra.mxu0 0.0
    %381 = vmatprep.subr.mxu0 0.0
    %382 = vmatpush1.msra.mxu0 0.0
    %383 = vmatprep.subr.mxu0 0.0
    %384 = vmatpush1.msra.mxu0 0.0
    %385 = vmatprep.subr.mxu0 0.0
    %386 = vmatpush1.msra.mxu0 0.0
    %387 = vmatprep.subr.mxu0 0.0
    %388 = vmatpush1.msra.mxu0 0.0
    %389 = vmatprep.subr.mxu0 0.0
    %390 = vmatpush1.msra.mxu0 0.0
    %391 = vmatprep.subr.mxu0 0.0
    %392 = vmatpush1.msra.mxu0 0.0
    %393 = vmatprep.subr.mxu0 0.0
    %394 = vmatpush1.msra.mxu0 0.0
    %395 = vmatprep.subr.mxu0 0.0
    %396 = vmatpush1.msra.mxu0 0.0
    %397 = vmatprep.subr.mxu0 0.0
    %398 = vmatpush1.msra.mxu0 0.0
    %399 = vmatprep.subr.mxu0 0.0
    %400 = vmatpush1.msra.mxu0 0.0
    %401 = vmatprep.subr.mxu0 0.0
    %402 = vmatpush1.msra.mxu0 0.0
    %403 = vmatprep.subr.mxu0 0.0
    %404 = vmatpush1.msra.mxu0 0.0
    %405 = vmatprep.subr.mxu0 0.0
    %406 = vmatpush1.msra.mxu0 0.0
    %407 = vmatprep.subr.mxu0 0.0
    %408 = vmatpush1.msra.mxu0 0.0
    %409 = vmatprep.subr.mxu0 0.0
    %410 = vmatpush1.msra.mxu0 0.0
    %411 = vmatprep.subr.mxu0 0.0
    %412 = vmatpush1.msra.mxu0 0.0
    %413 = vmatprep.subr.mxu0 0.0
    %414 = vmatpush1.msra.mxu0 0.0
    %415 = vmatprep.subr.mxu0 0.0
    %416 = vmatpush1.msra.mxu0 0.0
    %417 = vmatprep.subr.mxu0 0.0
    %418 = vmatpush1.msra.mxu0 0.0
    %419 = vmatprep.mubr.f32.mxu0 0.0
    %420 = vmatmul.mubr.f32.gmra.mrb[0].mxu0 %v353
    %v421 = vpop.f32.mrb[0].mxu0
    %v422 = vadd.f32 0.0, %v421
    %v423 = vpop.f32.mrb[0].mxu0
    %424 = vdwg.mxu0
    %v425 = vadd.f32 %v349, %v422
    %v426 = vxor.u32 %v425, 2147483648
    %v427 = vmul.f32 %v426, 1.442695
    %v428 = vpow.pop %v427
    %v429 = vadd.f32 %v428, 1.0
    %v430 = vrcp.pop %v429
    %v431 = vmul.f32 1.0, %v430
    %v432 = vadd.f32 %v422, %v115
    %434 = vrot.lane.b32.xlu0 %v432, 64
    %v435 = vpop.permute.xlu0 %434
    %v437 = vmul.f32 %v431, %v435
    %439 = vrot.lane.b32.xlu0 %v437, 64
    %v440 = vpop.permute.xlu0 %439
    %v442 = vadd.f32 %v349, %v440
    %v443 = vtanh.pop %v442
    %v444 = vsub.f32 1.0, %v431
    %446 = vrot.lane.b32.xlu0 %v443, 96
    %v447 = vpop.permute.xlu0 %446
    %v449 = vmul.f32 %v444, %v447
    %v450 = vmul.f32 %v431, %v347
    %v451 = vadd.f32 %v449, %v450
    %s452 = scalar_lea.vmem %s0, 8
    %v453 = vld [vmem:[%s452] sm:$0x3]
    %455 = vrot.lane.b32.xlu0 %v451, 96
    %v456 = vpop.permute.xlu0 %455
    %v457 = vsel %vm33, %v456, 0
    %459 = vmatprep.subr.mxu0 0.0
    %460 = vmatpush1.msra.mxu0 %v21
    %461 = vmatprep.subr.mxu0 0.0
    %462 = vmatpush1.msra.mxu0 %v22
    %463 = vmatprep.subr.mxu0 0.0
    %464 = vmatpush1.msra.mxu0 %v23
    %465 = vmatprep.subr.mxu0 0.0
    %466 = vmatpush1.msra.mxu0 %v24
    %467 = vmatprep.subr.mxu0 0.0
    %468 = vmatpush1.msra.mxu0 0.0
    %469 = vmatprep.subr.mxu0 0.0
    %470 = vmatpush1.msra.mxu0 0.0
    %471 = vmatprep.subr.mxu0 0.0
    %472 = vmatpush1.msra.mxu0 0.0
    %473 = vmatprep.subr.mxu0 0.0
    %474 = vmatpush1.msra.mxu0 0.0
    %475 = vmatprep.subr.mxu0 0.0
    %476 = vmatpush1.msra.mxu0 0.0
    %477 = vmatprep.subr.mxu0 0.0
    %478 = vmatpush1.msra.mxu0 0.0
    %479 = vmatprep.subr.mxu0 0.0
    %480 = vmatpush1.msra.mxu0 0.0
    %481 = vmatprep.subr.mxu0 0.0
    %482 = vmatpush1.msra.mxu0 0.0
    %483 = vmatprep.subr.mxu0 0.0
    %484 = vmatpush1.msra.mxu0 0.0
    %485 = vmatprep.subr.mxu0 0.0
    %486 = vmatpush1.msra.mxu0 0.0
    %487 = vmatprep.subr.mxu0 0.0
    %488 = vmatpush1.msra.mxu0 0.0
    %489 = vmatprep.subr.mxu0 0.0
    %490 = vmatpush1.msra.mxu0 0.0
    %491 = vmatprep.subr.mxu0 0.0
    %492 = vmatpush1.msra.mxu0 0.0
    %493 = vmatprep.subr.mxu0 0.0
    %494 = vmatpush1.msra.mxu0 0.0
    %495 = vmatprep.subr.mxu0 0.0
    %496 = vmatpush1.msra.mxu0 0.0
    %497 = vmatprep.subr.mxu0 0.0
    %498 = vmatpush1.msra.mxu0 0.0
    %499 = vmatprep.subr.mxu0 0.0
    %500 = vmatpush1.msra.mxu0 0.0
    %501 = vmatprep.subr.mxu0 0.0
    %502 = vmatpush1.msra.mxu0 0.0
    %503 = vmatprep.subr.mxu0 0.0
    %504 = vmatpush1.msra.mxu0 0.0
    %505 = vmatprep.subr.mxu0 0.0
    %506 = vmatpush1.msra.mxu0 0.0
    %507 = vmatprep.subr.mxu0 0.0
    %508 = vmatpush1.msra.mxu0 0.0
    %509 = vmatprep.subr.mxu0 0.0
    %510 = vmatpush1.msra.mxu0 0.0
    %511 = vmatprep.subr.mxu0 0.0
    %512 = vmatpush1.msra.mxu0 0.0
    %513 = vmatprep.subr.mxu0 0.0
    %514 = vmatpush1.msra.mxu0 0.0
    %515 = vmatprep.subr.mxu0 0.0
    %516 = vmatpush1.msra.mxu0 0.0
    %517 = vmatprep.subr.mxu0 0.0
    %518 = vmatpush1.msra.mxu0 0.0
    %519 = vmatprep.subr.mxu0 0.0
    %520 = vmatpush1.msra.mxu0 0.0
    %521 = vmatprep.subr.mxu0 0.0
    %522 = vmatpush1.msra.mxu0 0.0
    %523 = vmatprep.mubr.f32.mxu0 0.0
    %524 = vmatmul.mubr.f32.gmra.mrb[0].mxu0 %v457
    %v525 = vpop.f32.mrb[0].mxu0
    %v526 = vadd.f32 0.0, %v525
    %v527 = vpop.f32.mrb[0].mxu0
    %528 = vdwg.mxu0
    %v529 = vadd.f32 %v453, %v526
    %v530 = vxor.u32 %v529, 2147483648
    %v531 = vmul.f32 %v530, 1.442695
    %v532 = vpow.pop %v531
    %v533 = vadd.f32 %v532, 1.0
    %v534 = vrcp.pop %v533
    %v535 = vmul.f32 1.0, %v534
    %v536 = vadd.f32 %v526, %v115
    %538 = vrot.lane.b32.xlu0 %v536, 64
    %v539 = vpop.permute.xlu0 %538
    %v541 = vmul.f32 %v535, %v539
    %543 = vrot.lane.b32.xlu0 %v541, 64
    %v544 = vpop.permute.xlu0 %543
    %v546 = vadd.f32 %v453, %v544
    %v547 = vtanh.pop %v546
    %v548 = vsub.f32 1.0, %v535
    %550 = vrot.lane.b32.xlu0 %v547, 96
    %v551 = vpop.permute.xlu0 %550
    %v553 = vmul.f32 %v548, %v551
    %v554 = vmul.f32 %v535, %v451
    %v555 = vadd.f32 %v553, %v554
    %s556 = scalar_lea.vmem %s0, 10
    %v557 = vld [vmem:[%s556] sm:$0x3]
    %559 = vrot.lane.b32.xlu0 %v555, 96
    %v560 = vpop.permute.xlu0 %559
    %v561 = vsel %vm33, %v560, 0
    %563 = vmatprep.subr.mxu0 0.0
    %564 = vmatpush1.msra.mxu0 %v21
    %565 = vmatprep.subr.mxu0 0.0
    %566 = vmatpush1.msra.mxu0 %v22
    %567 = vmatprep.subr.mxu0 0.0
    %568 = vmatpush1.msra.mxu0 %v23
    %569 = vmatprep.subr.mxu0 0.0
    %570 = vmatpush1.msra.mxu0 %v24
    %571 = vmatprep.subr.mxu0 0.0
    %572 = vmatpush1.msra.mxu0 0.0
    %573 = vmatprep.subr.mxu0 0.0
    %574 = vmatpush1.msra.mxu0 0.0
    %575 = vmatprep.subr.mxu0 0.0
    %576 = vmatpush1.msra.mxu0 0.0
    %577 = vmatprep.subr.mxu0 0.0
    %578 = vmatpush1.msra.mxu0 0.0
    %579 = vmatprep.subr.mxu0 0.0
    %580 = vmatpush1.msra.mxu0 0.0
    %581 = vmatprep.subr.mxu0 0.0
    %582 = vmatpush1.msra.mxu0 0.0
    %583 = vmatprep.subr.mxu0 0.0
    %584 = vmatpush1.msra.mxu0 0.0
    %585 = vmatprep.subr.mxu0 0.0
    %586 = vmatpush1.msra.mxu0 0.0
    %587 = vmatprep.subr.mxu0 0.0
    %588 = vmatpush1.msra.mxu0 0.0
    %589 = vmatprep.subr.mxu0 0.0
    %590 = vmatpush1.msra.mxu0 0.0
    %591 = vmatprep.subr.mxu0 0.0
    %592 = vmatpush1.msra.mxu0 0.0
    %593 = vmatprep.subr.mxu0 0.0
    %594 = vmatpush1.msra.mxu0 0.0
    %595 = vmatprep.subr.mxu0 0.0
    %596 = vmatpush1.msra.mxu0 0.0
    %597 = vmatprep.subr.mxu0 0.0
    %598 = vmatpush1.msra.mxu0 0.0
    %599 = vmatprep.subr.mxu0 0.0
    %600 = vmatpush1.msra.mxu0 0.0
    %601 = vmatprep.subr.mxu0 0.0
    %602 = vmatpush1.msra.mxu0 0.0
    %603 = vmatprep.subr.mxu0 0.0
    %604 = vmatpush1.msra.mxu0 0.0
    %605 = vmatprep.subr.mxu0 0.0
    %606 = vmatpush1.msra.mxu0 0.0
    %607 = vmatprep.subr.mxu0 0.0
    %608 = vmatpush1.msra.mxu0 0.0
    %609 = vmatprep.subr.mxu0 0.0
    %610 = vmatpush1.msra.mxu0 0.0
    %611 = vmatprep.subr.mxu0 0.0
    %612 = vmatpush1.msra.mxu0 0.0
    %613 = vmatprep.subr.mxu0 0.0
    %614 = vmatpush1.msra.mxu0 0.0
    %615 = vmatprep.subr.mxu0 0.0
    %616 = vmatpush1.msra.mxu0 0.0
    %617 = vmatprep.subr.mxu0 0.0
    %618 = vmatpush1.msra.mxu0 0.0
    %619 = vmatprep.subr.mxu0 0.0
    %620 = vmatpush1.msra.mxu0 0.0
    %621 = vmatprep.subr.mxu0 0.0
    %622 = vmatpush1.msra.mxu0 0.0
    %623 = vmatprep.subr.mxu0 0.0
    %624 = vmatpush1.msra.mxu0 0.0
    %625 = vmatprep.subr.mxu0 0.0
    %626 = vmatpush1.msra.mxu0 0.0
    %627 = vmatprep.mubr.f32.mxu0 0.0
    %628 = vmatmul.mubr.f32.gmra.mrb[0].mxu0 %v561
    %v629 = vpop.f32.mrb[0].mxu0
    %v630 = vadd.f32 0.0, %v629
    %v631 = vpop.f32.mrb[0].mxu0
    %632 = vdwg.mxu0
    %v633 = vadd.f32 %v557, %v630
    %v634 = vxor.u32 %v633, 2147483648
    %v635 = vmul.f32 %v634, 1.442695
    %v636 = vpow.pop %v635
    %v637 = vadd.f32 %v636, 1.0
    %v638 = vrcp.pop %v637
    %v639 = vmul.f32 1.0, %v638
    %v640 = vadd.f32 %v630, %v115
    %642 = vrot.lane.b32.xlu0 %v640, 64
    %v643 = vpop.permute.xlu0 %642
    %v645 = vmul.f32 %v639, %v643
    %647 = vrot.lane.b32.xlu0 %v645, 64
    %v648 = vpop.permute.xlu0 %647
    %v650 = vadd.f32 %v557, %v648
    %v651 = vtanh.pop %v650
    %v652 = vsub.f32 1.0, %v639
    %654 = vrot.lane.b32.xlu0 %v651, 96
    %v655 = vpop.permute.xlu0 %654
    %v657 = vmul.f32 %v652, %v655
    %v658 = vmul.f32 %v639, %v555
    %v659 = vadd.f32 %v657, %v658
    %s660 = scalar_lea.vmem %s0, 12
    %v661 = vld [vmem:[%s660] sm:$0x3]
    %663 = vrot.lane.b32.xlu0 %v659, 96
    %v664 = vpop.permute.xlu0 %663
    %v665 = vsel %vm33, %v664, 0
    %667 = vmatprep.subr.mxu0 0.0
    %668 = vmatpush1.msra.mxu0 %v21
    %669 = vmatprep.subr.mxu0 0.0
    %670 = vmatpush1.msra.mxu0 %v22
    %671 = vmatprep.subr.mxu0 0.0
    %672 = vmatpush1.msra.mxu0 %v23
    %673 = vmatprep.subr.mxu0 0.0
    %674 = vmatpush1.msra.mxu0 %v24
    %675 = vmatprep.subr.mxu0 0.0
    %676 = vmatpush1.msra.mxu0 0.0
    %677 = vmatprep.subr.mxu0 0.0
    %678 = vmatpush1.msra.mxu0 0.0
    %679 = vmatprep.subr.mxu0 0.0
    %680 = vmatpush1.msra.mxu0 0.0
    %681 = vmatprep.subr.mxu0 0.0
    %682 = vmatpush1.msra.mxu0 0.0
    %683 = vmatprep.subr.mxu0 0.0
    %684 = vmatpush1.msra.mxu0 0.0
    %685 = vmatprep.subr.mxu0 0.0
    %686 = vmatpush1.msra.mxu0 0.0
    %687 = vmatprep.subr.mxu0 0.0
    %688 = vmatpush1.msra.mxu0 0.0
    %689 = vmatprep.subr.mxu0 0.0
    %690 = vmatpush1.msra.mxu0 0.0
    %691 = vmatprep.subr.mxu0 0.0
    %692 = vmatpush1.msra.mxu0 0.0
    %693 = vmatprep.subr.mxu0 0.0
    %694 = vmatpush1.msra.mxu0 0.0
    %695 = vmatprep.subr.mxu0 0.0
    %696 = vmatpush1.msra.mxu0 0.0
    %697 = vmatprep.subr.mxu0 0.0
    %698 = vmatpush1.msra.mxu0 0.0
    %699 = vmatprep.subr.mxu0 0.0
    %700 = vmatpush1.msra.mxu0 0.0
    %701 = vmatprep.subr.mxu0 0.0
    %702 = vmatpush1.msra.mxu0 0.0
    %703 = vmatprep.subr.mxu0 0.0
    %704 = vmatpush1.msra.mxu0 0.0
    %705 = vmatprep.subr.mxu0 0.0
    %706 = vmatpush1.msra.mxu0 0.0
    %707 = vmatprep.subr.mxu0 0.0
    %708 = vmatpush1.msra.mxu0 0.0
    %709 = vmatprep.subr.mxu0 0.0
    %710 = vmatpush1.msra.mxu0 0.0
    %711 = vmatprep.subr.mxu0 0.0
    %712 = vmatpush1.msra.mxu0 0.0
    %713 = vmatprep.subr.mxu0 0.0
    %714 = vmatpush1.msra.mxu0 0.0
    %715 = vmatprep.subr.mxu0 0.0
    %716 = vmatpush1.msra.mxu0 0.0
    %717 = vmatprep.subr.mxu0 0.0
    %718 = vmatpush1.msra.mxu0 0.0
    %719 = vmatprep.subr.mxu0 0.0
    %720 = vmatpush1.msra.mxu0 0.0
    %721 = vmatprep.subr.mxu0 0.0
    %722 = vmatpush1.msra.mxu0 0.0
    %723 = vmatprep.subr.mxu0 0.0
    %724 = vmatpush1.msra.mxu0 0.0
    %725 = vmatprep.subr.mxu0 0.0
    %726 = vmatpush1.msra.mxu0 0.0
    %727 = vmatprep.subr.mxu0 0.0
    %728 = vmatpush1.msra.mxu0 0.0
    %729 = vmatprep.subr.mxu0 0.0
    %730 = vmatpush1.msra.mxu0 0.0
    %731 = vmatprep.mubr.f32.mxu0 0.0
    %732 = vmatmul.mubr.f32.gmra.mrb[0].mxu0 %v665
    %v733 = vpop.f32.mrb[0].mxu0
    %v734 = vadd.f32 0.0, %v733
    %v735 = vpop.f32.mrb[0].mxu0
    %736 = vdwg.mxu0
    %v737 = vadd.f32 %v661, %v734
    %v738 = vxor.u32 %v737, 2147483648
    %v739 = vmul.f32 %v738, 1.442695
    %v740 = vpow.pop %v739
    %v741 = vadd.f32 %v740, 1.0
    %v742 = vrcp.pop %v741
    %v743 = vmul.f32 1.0, %v742
    %v744 = vadd.f32 %v734, %v115
    %746 = vrot.lane.b32.xlu0 %v744, 64
    %v747 = vpop.permute.xlu0 %746
    %v749 = vmul.f32 %v743, %v747
    %751 = vrot.lane.b32.xlu0 %v749, 64
    %v752 = vpop.permute.xlu0 %751
    %v754 = vadd.f32 %v661, %v752
    %v755 = vtanh.pop %v754
    %v756 = vsub.f32 1.0, %v743
    %758 = vrot.lane.b32.xlu0 %v755, 96
    %v759 = vpop.permute.xlu0 %758
    %v761 = vmul.f32 %v756, %v759
    %v762 = vmul.f32 %v743, %v659
    %v763 = vadd.f32 %v761, %v762
    %s764 = scalar_lea.vmem %s0, 14
    %v765 = vld [vmem:[%s764] sm:$0x3]
    %767 = vrot.lane.b32.xlu0 %v763, 96
    %v768 = vpop.permute.xlu0 %767
    %v769 = vsel %vm33, %v768, 0
    %771 = vmatprep.subr.mxu0 0.0
    %772 = vmatpush1.msra.mxu0 %v21
    %773 = vmatprep.subr.mxu0 0.0
    %774 = vmatpush1.msra.mxu0 %v22
    %775 = vmatprep.subr.mxu0 0.0
    %776 = vmatpush1.msra.mxu0 %v23
    %777 = vmatprep.subr.mxu0 0.0
    %778 = vmatpush1.msra.mxu0 %v24
    %779 = vmatprep.subr.mxu0 0.0
    %780 = vmatpush1.msra.mxu0 0.0
    %781 = vmatprep.subr.mxu0 0.0
    %782 = vmatpush1.msra.mxu0 0.0
    %783 = vmatprep.subr.mxu0 0.0
    %784 = vmatpush1.msra.mxu0 0.0
    %785 = vmatprep.subr.mxu0 0.0
    %786 = vmatpush1.msra.mxu0 0.0
    %787 = vmatprep.subr.mxu0 0.0
    %788 = vmatpush1.msra.mxu0 0.0
    %789 = vmatprep.subr.mxu0 0.0
    %790 = vmatpush1.msra.mxu0 0.0
    %791 = vmatprep.subr.mxu0 0.0
    %792 = vmatpush1.msra.mxu0 0.0
    %793 = vmatprep.subr.mxu0 0.0
    %794 = vmatpush1.msra.mxu0 0.0
    %795 = vmatprep.subr.mxu0 0.0
    %796 = vmatpush1.msra.mxu0 0.0
    %797 = vmatprep.subr.mxu0 0.0
    %798 = vmatpush1.msra.mxu0 0.0
    %799 = vmatprep.subr.mxu0 0.0
    %800 = vmatpush1.msra.mxu0 0.0
    %801 = vmatprep.subr.mxu0 0.0
    %802 = vmatpush1.msra.mxu0 0.0
    %803 = vmatprep.subr.mxu0 0.0
    %804 = vmatpush1.msra.mxu0 0.0
    %805 = vmatprep.subr.mxu0 0.0
    %806 = vmatpush1.msra.mxu0 0.0
    %807 = vmatprep.subr.mxu0 0.0
    %808 = vmatpush1.msra.mxu0 0.0
    %809 = vmatprep.subr.mxu0 0.0
    %810 = vmatpush1.msra.mxu0 0.0
    %811 = vmatprep.subr.mxu0 0.0
    %812 = vmatpush1.msra.mxu0 0.0
    %813 = vmatprep.subr.mxu0 0.0
    %814 = vmatpush1.msra.mxu0 0.0
    %815 = vmatprep.subr.mxu0 0.0
    %816 = vmatpush1.msra.mxu0 0.0
    %817 = vmatprep.subr.mxu0 0.0
    %818 = vmatpush1.msra.mxu0 0.0
    %819 = vmatprep.subr.mxu0 0.0
    %820 = vmatpush1.msra.mxu0 0.0
    %821 = vmatprep.subr.mxu0 0.0
    %822 = vmatpush1.msra.mxu0 0.0
    %823 = vmatprep.subr.mxu0 0.0
    %824 = vmatpush1.msra.mxu0 0.0
    %825 = vmatprep.subr.mxu0 0.0
    %826 = vmatpush1.msra.mxu0 0.0
    %827 = vmatprep.subr.mxu0 0.0
    %828 = vmatpush1.msra.mxu0 0.0
    %829 = vmatprep.subr.mxu0 0.0
    %830 = vmatpush1.msra.mxu0 0.0
    %831 = vmatprep.subr.mxu0 0.0
    %832 = vmatpush1.msra.mxu0 0.0
    %833 = vmatprep.subr.mxu0 0.0
    %834 = vmatpush1.msra.mxu0 0.0
    %835 = vmatprep.mubr.f32.mxu0 0.0
    %836 = vmatmul.mubr.f32.gmra.mrb[0].mxu0 %v769
    %v837 = vpop.f32.mrb[0].mxu0
    %v838 = vadd.f32 0.0, %v837
    %v839 = vpop.f32.mrb[0].mxu0
    %840 = vdwg.mxu0
    %v841 = vadd.f32 %v765, %v838
    %v842 = vxor.u32 %v841, 2147483648
    %v843 = vmul.f32 %v842, 1.442695
    %v844 = vpow.pop %v843
    %v845 = vadd.f32 %v844, 1.0
    %v846 = vrcp.pop %v845
    %v847 = vmul.f32 1.0, %v846
    %v848 = vadd.f32 %v838, %v115
    %850 = vrot.lane.b32.xlu0 %v848, 64
    %v851 = vpop.permute.xlu0 %850
    %v853 = vmul.f32 %v847, %v851
    %855 = vrot.lane.b32.xlu0 %v853, 64
    %v856 = vpop.permute.xlu0 %855
    %v858 = vadd.f32 %v765, %v856
    %v859 = vtanh.pop %v858
    %v860 = vsub.f32 1.0, %v847
    %862 = vrot.lane.b32.xlu0 %v859, 96
    %v863 = vpop.permute.xlu0 %862
    %v865 = vmul.f32 %v860, %v863
    %v866 = vmul.f32 %v847, %v763
    %v867 = vadd.f32 %v865, %v866
    %869 = vrot.lane.b32.xlu0 %v867, 96
    %v870 = vpop.permute.xlu0 %869
    %vm872 = vcmask 254976
    %873 = vst.msk [vmem:[#allocation2] sm:$0x3] %vm872, %v870
    // Predicated region
    $region18: #{_lambda_.1} parent=1 // pred_check
      _
    $region19: #{_lambda_.1} parent=1 // pred_check_branch
      %875 = sbr.rel (0) target = $region21
    $region20: #{_lambda_.1} parent=1 // pred_region
      %s877 = ssub.s32 32, 32
      %878 = vsyncadd [#allocation3], %s877
      %s880 = sshll.u32 [#allocation2], 4
      %s881 = int_to_ptr.vmem [resolvable:$true] %s880
      %883 = dma.vmem_to_hbm [thread:$0]  %s881, 32, %s3, [#allocation3]
    $region21: #{_lambda_.1} parent=1 // pred_fallthru
      _
    // Predicated region
    $region22: #{_lambda_.1} parent=1 // pred_check
      _
    $region23: #{_lambda_.1} parent=1 // pred_check_branch
      %885 = sbr.rel (0) target = $region25
    $region24: #{_lambda_.1} parent=1 // pred_region
      %886 = dma.done [#allocation3], 32
    $region25: #{_lambda_.1} parent=1 // pred_fallthru
      _
    %887 = vsyncpa [#allocation3], 1

</llo_original>
